<compile_context>
chip_gen: v7x
topology: tpu7x:2x2x1
jax: 0.10.0
libtpu: 0.0.40
codegen_flags: <defaults>
</compile_context>

<pallas_src>
import functools

import jax
import jax.numpy as jnp
from jax.experimental import pallas as pl
from jax.experimental.pallas import tpu as pltpu


def _round_up(n, m):
    return ((n + m - 1) // m) * m


def _pad2(a, rows, cols):
    r, c = a.shape
    return jnp.pad(a, ((0, rows - r), (0, cols - c)))


def _full_spec(shape):
    n = len(shape)
    return pl.BlockSpec(shape, lambda *_: (0,) * n)


# ----------------------------------------------------------------------------
# Fused kernel: all layers in one pallas_call, activations stay in VMEM/vregs.
# ----------------------------------------------------------------------------
def _fused_variational_net_kernel(*refs, n_layers):
    # refs layout: [x, (w_mu, w_sigma, w_eps, b_mu, b_sigma, b_eps) * n_layers, out]
    x_ref = refs[0]
    o_ref = refs[-1]

    h = x_ref[...]                                              # (batch_p, in_p)
    for layer in range(n_layers):
        base = 1 + 6 * layer
        wmu_ref, wsig_ref, weps_ref, bmu_ref, bsig_ref, beps_ref = refs[base:base + 6]

        # Reparameterized weight / bias (elementwise on the VPU).
        # sigma = softplus(rho) was hoisted to the wrapper (one-time cost).
        w = wmu_ref[...] + weps_ref[...] * wsig_ref[...]        # (out_p, in_p)
        b = bmu_ref[...] + beps_ref[...] * bsig_ref[...]        # (1, out_p)

        # F.linear(x, W, b) = x @ W.T + b. Contract the last dim of both
        # operands so no transpose of W is materialized before the MXU.
        h = jax.lax.dot_general(
            h, w,
            dimension_numbers=(((1,), (1,)), ((), ())),
            preferred_element_type=jnp.float32,
        ) + b

        if layer < n_layers - 1:                                # hidden layers only
            h = jnp.maximum(h, 0.0)

    o_ref[...] = h.astype(o_ref.dtype)


# ----------------------------------------------------------------------------
# Parameter preparation (one-time): softplus + lane/sublane padding.
# ----------------------------------------------------------------------------
def prepare_variational_params(params):
    prepared = []
    for p in params:
        out_f, in_f = p["weight_mu"].shape
        out_p = _round_up(out_f, 128)
        in_p = _round_up(in_f, 128)
        prepared.append(dict(
            out_features=out_f,
            in_features=in_f,
            weight_mu=_pad2(p["weight_mu"], out_p, in_p),
            weight_sigma=_pad2(jax.nn.softplus(p["weight_rho"]), out_p, in_p),
            bias_mu=_pad2(p["bias_mu"].reshape(1, out_f), 1, out_p),
            bias_sigma=_pad2(jax.nn.softplus(p["bias_rho"]).reshape(1, out_f), 1, out_p),
        ))
    return prepared


# ----------------------------------------------------------------------------
# Forward pass: one fused pallas_call for the whole net.
# ----------------------------------------------------------------------------
def variational_net_forward(prepared, x, noise_key):
    n_layers = len(prepared)
    batch, in_f = x.shape
    batch_p = _round_up(batch, 8)
    in_p0 = prepared[0]["weight_mu"].shape[1]

    inputs = [_pad2(x.astype(jnp.float32), batch_p, in_p0)]
    specs = [_full_spec(inputs[0].shape)]

    for p in prepared:
        out_f, in_f_l = p["out_features"], p["in_features"]
        out_p, in_p_l = p["weight_mu"].shape
        noise_key, kw, kb = jax.random.split(noise_key, 3)
        # Sample noise at the true (unpadded) shapes so the stream matches the
        # reference; pad regions are zero => padded W, b are exactly zero.
        eps_w = jax.random.normal(kw, (out_f, in_f_l), jnp.float32)
        eps_b = jax.random.normal(kb, (out_f,), jnp.float32)
        layer_args = (
            p["weight_mu"],
            p["weight_sigma"],
            _pad2(eps_w, out_p, in_p_l),
            p["bias_mu"],
            p["bias_sigma"],
            _pad2(eps_b.reshape(1, out_f), 1, out_p),
        )
        for arr in layer_args:
            inputs.append(arr)
            specs.append(_full_spec(arr.shape))

    out_f_last = prepared[-1]["out_features"]
    out_p_last = prepared[-1]["weight_mu"].shape[0]

    kernel = functools.partial(_fused_variational_net_kernel, n_layers=n_layers)
    out_padded = pl.pallas_call(
        kernel,
        out_shape=jax.ShapeDtypeStruct((batch_p, out_p_last), jnp.float32),
        grid=(),
        in_specs=specs,
        out_specs=_full_spec((batch_p, out_p_last)),
        compiler_params=pltpu.CompilerParams(vmem_limit_bytes=32 * 1024 * 1024),
    )(*inputs)

    return out_padded[:batch, :out_f_last]


# ----------------------------------------------------------------------------
# Synthetic parameters matching VariationalNet.__init__ shapes.
# ----------------------------------------------------------------------------
def init_variational_net(key, input_dim, hidden_dims, output_dim):
    dims = [input_dim] + [input_dim] * hidden_dims + [output_dim]
    params = []
    for i in range(len(dims) - 1):
        in_f, out_f = dims[i], dims[i + 1]
        key, k1, k2 = jax.random.split(key, 3)
        params.append(dict(
            weight_mu=jax.random.normal(k1, (out_f, in_f), jnp.float32) * 0.1,
            weight_rho=jnp.full((out_f, in_f), -3.0, jnp.float32),
            bias_mu=jax.random.normal(k2, (out_f,), jnp.float32) * 0.1,
            bias_rho=jnp.full((out_f,), -3.0, jnp.float32),
        ))
    return params


if __name__ == "__main__":
    key = jax.random.PRNGKey(0)
    k_param, k_data, k_noise = jax.random.split(key, 3)

    input_dim, hidden_dims, output_dim = 32, 2, 8
    batch = 4

    params = init_variational_net(k_param, input_dim, hidden_dims, output_dim)
    x = jax.random.normal(k_data, (batch, input_dim), jnp.float32)

    prepared = prepare_variational_params(params)
    out = variational_net_forward(prepared, x, k_noise)
    jax.block_until_ready(out)

    # Pure-JAX reference (same noise stream).
    def ref_forward(params, x, noise_key):
        n_layers = len(params)
        for i, p in enumerate(params):
            noise_key, kw, kb = jax.random.split(noise_key, 3)
            eps_w = jax.random.normal(kw, p["weight_mu"].shape, jnp.float32)
            eps_b = jax.random.normal(kb, p["bias_mu"].shape, jnp.float32)
            w = p["weight_mu"] + eps_w * jax.nn.softplus(p["weight_rho"])
            b = p["bias_mu"] + eps_b * jax.nn.softplus(p["bias_rho"])
            x = x @ w.T + b
            if i < n_layers - 1:
                x = jnp.maximum(x, 0.0)
        return x

    ref = ref_forward(params, x, k_noise)
    assert out.shape == (batch, output_dim)
    assert jnp.allclose(out, ref, atol=1e-4, rtol=1e-4)

    print("KERNEL_OK")
</pallas_src>

<mosaic_0001>
module attributes {stable_mosaic.version = 11 : i64} {
  func.func @_fused_variational_net_kernel(%arg0: memref<8x128xf32, #tpu.memory_space<vmem>>, %arg1: memref<128x128xf32, #tpu.memory_space<vmem>>, %arg2: memref<128x128xf32, #tpu.memory_space<vmem>>, %arg3: memref<128x128xf32, #tpu.memory_space<vmem>>, %arg4: memref<1x128xf32, #tpu.memory_space<vmem>>, %arg5: memref<1x128xf32, #tpu.memory_space<vmem>>, %arg6: memref<1x128xf32, #tpu.memory_space<vmem>>, %arg7: memref<128x128xf32, #tpu.memory_space<vmem>>, %arg8: memref<128x128xf32, #tpu.memory_space<vmem>>, %arg9: memref<128x128xf32, #tpu.memory_space<vmem>>, %arg10: memref<1x128xf32, #tpu.memory_space<vmem>>, %arg11: memref<1x128xf32, #tpu.memory_space<vmem>>, %arg12: memref<1x128xf32, #tpu.memory_space<vmem>>, %arg13: memref<128x128xf32, #tpu.memory_space<vmem>>, %arg14: memref<128x128xf32, #tpu.memory_space<vmem>>, %arg15: memref<128x128xf32, #tpu.memory_space<vmem>>, %arg16: memref<1x128xf32, #tpu.memory_space<vmem>>, %arg17: memref<1x128xf32, #tpu.memory_space<vmem>>, %arg18: memref<1x128xf32, #tpu.memory_space<vmem>>, %arg19: memref<8x128xf32, #tpu.memory_space<vmem>>) attributes {dimension_semantics = [], scalar_prefetch = 0 : i64, scratch_operands = 0 : i64, tpu.core_type = #tpu.core_type<tc>} {
    %c0 = arith.constant 0 : index
    %c0_0 = arith.constant 0 : index
    %0 = vector.load %arg0[%c0, %c0_0] : memref<8x128xf32, #tpu.memory_space<vmem>>, vector<8x128xf32>
    %c0_1 = arith.constant 0 : index
    %c0_2 = arith.constant 0 : index
    %1 = vector.load %arg1[%c0_1, %c0_2] : memref<128x128xf32, #tpu.memory_space<vmem>>, vector<128x128xf32>
    %c0_3 = arith.constant 0 : index
    %c0_4 = arith.constant 0 : index
    %2 = vector.load %arg3[%c0_3, %c0_4] : memref<128x128xf32, #tpu.memory_space<vmem>>, vector<128x128xf32>
    %c0_5 = arith.constant 0 : index
    %c0_6 = arith.constant 0 : index
    %3 = vector.load %arg2[%c0_5, %c0_6] : memref<128x128xf32, #tpu.memory_space<vmem>>, vector<128x128xf32>
    %4 = arith.mulf %2, %3 : vector<128x128xf32>
    %5 = arith.addf %1, %4 : vector<128x128xf32>
    %c0_7 = arith.constant 0 : index
    %c0_8 = arith.constant 0 : index
    %6 = vector.load %arg4[%c0_7, %c0_8] : memref<1x128xf32, #tpu.memory_space<vmem>>, vector<1x128xf32>
    %c0_9 = arith.constant 0 : index
    %c0_10 = arith.constant 0 : index
    %7 = vector.load %arg6[%c0_9, %c0_10] : memref<1x128xf32, #tpu.memory_space<vmem>>, vector<1x128xf32>
    %c0_11 = arith.constant 0 : index
    %c0_12 = arith.constant 0 : index
    %8 = vector.load %arg5[%c0_11, %c0_12] : memref<1x128xf32, #tpu.memory_space<vmem>>, vector<1x128xf32>
    %9 = arith.mulf %7, %8 : vector<1x128xf32>
    %10 = arith.addf %6, %9 : vector<1x128xf32>
    %cst = arith.constant dense<0.000000e+00> : vector<8x128xf32>
    %11 = tpu.matmul %0, %5, %cst {dimension_numbers = #tpu.dot_dimension_numbers<[1], [1], [0], [0], [0, 0, 1, 0], [], []>} : vector<8x128xf32>, vector<128x128xf32>, vector<8x128xf32> -> vector<8x128xf32>
    %12 = vector.broadcast %10 : vector<1x128xf32> to vector<8x128xf32>
    %13 = arith.addf %11, %12 : vector<8x128xf32>
    %cst_13 = arith.constant 0.000000e+00 : f32
    %14 = vector.broadcast %cst_13 : f32 to vector<8x128xf32>
    %15 = arith.maximumf %13, %14 : vector<8x128xf32>
    %c0_14 = arith.constant 0 : index
    %c0_15 = arith.constant 0 : index
    %16 = vector.load %arg7[%c0_14, %c0_15] : memref<128x128xf32, #tpu.memory_space<vmem>>, vector<128x128xf32>
    %c0_16 = arith.constant 0 : index
    %c0_17 = arith.constant 0 : index
    %17 = vector.load %arg9[%c0_16, %c0_17] : memref<128x128xf32, #tpu.memory_space<vmem>>, vector<128x128xf32>
    %c0_18 = arith.constant 0 : index
    %c0_19 = arith.constant 0 : index
    %18 = vector.load %arg8[%c0_18, %c0_19] : memref<128x128xf32, #tpu.memory_space<vmem>>, vector<128x128xf32>
    %19 = arith.mulf %17, %18 : vector<128x128xf32>
    %20 = arith.addf %16, %19 : vector<128x128xf32>
    %c0_20 = arith.constant 0 : index
    %c0_21 = arith.constant 0 : index
    %21 = vector.load %arg10[%c0_20, %c0_21] : memref<1x128xf32, #tpu.memory_space<vmem>>, vector<1x128xf32>
    %c0_22 = arith.constant 0 : index
    %c0_23 = arith.constant 0 : index
    %22 = vector.load %arg12[%c0_22, %c0_23] : memref<1x128xf32, #tpu.memory_space<vmem>>, vector<1x128xf32>
    %c0_24 = arith.constant 0 : index
    %c0_25 = arith.constant 0 : index
    %23 = vector.load %arg11[%c0_24, %c0_25] : memref<1x128xf32, #tpu.memory_space<vmem>>, vector<1x128xf32>
    %24 = arith.mulf %22, %23 : vector<1x128xf32>
    %25 = arith.addf %21, %24 : vector<1x128xf32>
    %cst_26 = arith.constant dense<0.000000e+00> : vector<8x128xf32>
    %26 = tpu.matmul %15, %20, %cst_26 {dimension_numbers = #tpu.dot_dimension_numbers<[1], [1], [0], [0], [0, 0, 1, 0], [], []>} : vector<8x128xf32>, vector<128x128xf32>, vector<8x128xf32> -> vector<8x128xf32>
    %27 = vector.broadcast %25 : vector<1x128xf32> to vector<8x128xf32>
    %28 = arith.addf %26, %27 : vector<8x128xf32>
    %cst_27 = arith.constant 0.000000e+00 : f32
    %29 = vector.broadcast %cst_27 : f32 to vector<8x128xf32>
    %30 = arith.maximumf %28, %29 : vector<8x128xf32>
    %c0_28 = arith.constant 0 : index
    %c0_29 = arith.constant 0 : index
    %31 = vector.load %arg13[%c0_28, %c0_29] : memref<128x128xf32, #tpu.memory_space<vmem>>, vector<128x128xf32>
    %c0_30 = arith.constant 0 : index
    %c0_31 = arith.constant 0 : index
    %32 = vector.load %arg15[%c0_30, %c0_31] : memref<128x128xf32, #tpu.memory_space<vmem>>, vector<128x128xf32>
    %c0_32 = arith.constant 0 : index
    %c0_33 = arith.constant 0 : index
    %33 = vector.load %arg14[%c0_32, %c0_33] : memref<128x128xf32, #tpu.memory_space<vmem>>, vector<128x128xf32>
    %34 = arith.mulf %32, %33 : vector<128x128xf32>
    %35 = arith.addf %31, %34 : vector<128x128xf32>
    %c0_34 = arith.constant 0 : index
    %c0_35 = arith.constant 0 : index
    %36 = vector.load %arg16[%c0_34, %c0_35] : memref<1x128xf32, #tpu.memory_space<vmem>>, vector<1x128xf32>
    %c0_36 = arith.constant 0 : index
    %c0_37 = arith.constant 0 : index
    %37 = vector.load %arg18[%c0_36, %c0_37] : memref<1x128xf32, #tpu.memory_space<vmem>>, vector<1x128xf32>
    %c0_38 = arith.constant 0 : index
    %c0_39 = arith.constant 0 : index
    %38 = vector.load %arg17[%c0_38, %c0_39] : memref<1x128xf32, #tpu.memory_space<vmem>>, vector<1x128xf32>
    %39 = arith.mulf %37, %38 : vector<1x128xf32>
    %40 = arith.addf %36, %39 : vector<1x128xf32>
    %cst_40 = arith.constant dense<0.000000e+00> : vector<8x128xf32>
    %41 = tpu.matmul %30, %35, %cst_40 {dimension_numbers = #tpu.dot_dimension_numbers<[1], [1], [0], [0], [0, 0, 1, 0], [], []>} : vector<8x128xf32>, vector<128x128xf32>, vector<8x128xf32> -> vector<8x128xf32>
    %42 = vector.broadcast %40 : vector<1x128xf32> to vector<8x128xf32>
    %43 = arith.addf %41, %42 : vector<8x128xf32>
    %c0_41 = arith.constant 0 : index
    %c0_42 = arith.constant 0 : index
    %44 = vector.load %arg19[%c0_41, %c0_42] : memref<8x128xf32, #tpu.memory_space<vmem>>, vector<8x128xf32>
    tpu.vector_store %arg19[%c0_41, %c0_42], %43 {strides = array<i32>} : memref<8x128xf32, #tpu.memory_space<vmem>>, vector<8x128xf32>,
    return
  }
}

</mosaic_0001>

<llo_original>
// kernel: tpu_custom_call.1
$region0: #{tpu_custom_call.1}
  #allocation0 [shape = 'u32[]', space=smem, size = 0x4, offset = 0x4, fixed_abs, tag = 'smem constant byte address 0x4 - core index']
  #allocation1 [shape = 'u32[144,128]{1,0:T(1,128)}', space=vmem, size = 0x12000, scoped, tag = 'internal scratch']
  %s0 = inlined_call_operand.hbm [shape: f32[8,128], index: 0, kind: input, shape index: {}]
  %s1 = inlined_call_operand.hbm [shape: f32[128,128], index: 1, kind: input, shape index: {}]
  %s2 = inlined_call_operand.hbm [shape: f32[128,128], index: 2, kind: input, shape index: {}]
  %s3 = inlined_call_operand.hbm [shape: f32[128,128], index: 3, kind: input, shape index: {}]
  %s4 = inlined_call_operand.vmem [shape: f32[1,128], index: 4, kind: input, shape index: {}]
  %s5 = inlined_call_operand.vmem [shape: f32[1,128], index: 5, kind: input, shape index: {}]
  %s6 = inlined_call_operand.vmem [shape: f32[1,128], index: 6, kind: input, shape index: {}]
  %s7 = inlined_call_operand.hbm [shape: f32[128,128], index: 7, kind: input, shape index: {}]
  %s8 = inlined_call_operand.hbm [shape: f32[128,128], index: 8, kind: input, shape index: {}]
  %s9 = inlined_call_operand.hbm [shape: f32[128,128], index: 9, kind: input, shape index: {}]
  %s10 = inlined_call_operand.vmem [shape: f32[1,128], index: 10, kind: input, shape index: {}]
  %s11 = inlined_call_operand.vmem [shape: f32[1,128], index: 11, kind: input, shape index: {}]
  %s12 = inlined_call_operand.vmem [shape: f32[1,128], index: 12, kind: input, shape index: {}]
  %s13 = inlined_call_operand.hbm [shape: f32[128,128], index: 13, kind: input, shape index: {}]
  %s14 = inlined_call_operand.hbm [shape: f32[128,128], index: 14, kind: input, shape index: {}]
  %s15 = inlined_call_operand.hbm [shape: f32[128,128], index: 15, kind: input, shape index: {}]
  %s16 = inlined_call_operand.vmem [shape: f32[1,128], index: 16, kind: input, shape index: {}]
  %s17 = inlined_call_operand.vmem [shape: f32[1,128], index: 17, kind: input, shape index: {}]
  %s18 = inlined_call_operand.vmem [shape: f32[1,128], index: 18, kind: input, shape index: {}]
  %s19 = inlined_call_operand.hbm [shape: f32[8,128], index: 19, kind: output, shape index: {}]
  %s20 = sld [smem:[#allocation0]]
  $region126: #{tpu_custom_call.1} parent=0
    _
  %s22 = ssub.s32 1, %s20
  %s23 = scalar_select 0, %s22, %s20
  $region1: #{tpu_custom_call.1} parent=0
    #allocation2 [shape = 'u8[4096]{0}', space=vmem, size = 0x1000, scoped, tag = 'input window, operand 0, single buffered']
    #allocation3 [shape = 's32[1]{0}', space=sflag, size = 0x4, scoped, tag = 'scoped memory for tpu_custom_call.1']
    #allocation4 [shape = 's32[1]{0}', space=sflag, size = 0x4, scoped, tag = 'scoped memory for tpu_custom_call.1']
    #allocation5 [shape = 'u8[65536]{0}', space=vmem, size = 0x10000, scoped, tag = 'input window, operand 1, single buffered']
    #allocation6 [shape = 's32[1]{0}', space=sflag, size = 0x4, scoped, tag = 'scoped memory for tpu_custom_call.1']
    #allocation7 [shape = 'u8[65536]{0}', space=vmem, size = 0x10000, scoped, tag = 'input window, operand 2, single buffered']
    #allocation8 [shape = 'u8[65536]{0}', space=vmem, size = 0x10000, scoped, tag = 'input window, operand 3, single buffered']
    #allocation9 [shape = 's32[1]{0}', space=sflag, size = 0x4, scoped, tag = 'scoped memory for tpu_custom_call.1']
    #allocation10 [shape = 'u8[65536]{0}', space=vmem, size = 0x10000, scoped, tag = 'input window, operand 7, single buffered']
    #allocation11 [shape = 'u8[65536]{0}', space=vmem, size = 0x10000, scoped, tag = 'input window, operand 8, single buffered']
    #allocation12 [shape = 's32[1]{0}', space=sflag, size = 0x4, scoped, tag = 'scoped memory for tpu_custom_call.1']
    #allocation13 [shape = 'u8[65536]{0}', space=vmem, size = 0x10000, scoped, tag = 'input window, operand 9, single buffered']
    #allocation14 [shape = 'u8[65536]{0}', space=vmem, size = 0x10000, scoped, tag = 'input window, operand 13, single buffered']
    #allocation15 [shape = 's32[1]{0}', space=sflag, size = 0x4, scoped, tag = 'scoped memory for tpu_custom_call.1']
    #allocation16 [shape = 'u8[65536]{0}', space=vmem, size = 0x10000, scoped, tag = 'input window, operand 14, single buffered']
    #allocation17 [shape = 'u8[65536]{0}', space=vmem, size = 0x10000, scoped, tag = 'input window, operand 15, single buffered']
    #allocation18 [shape = 's32[1]{0}', space=sflag, size = 0x4, scoped, tag = 'scoped memory for tpu_custom_call.1']
    #allocation19 [shape = 'u8[4096]{0}', space=vmem, size = 0x1000, scoped, tag = 'output window, operand 0, single buffered']
    %24 = vsyncpa [#allocation3], 0
    %25 = vsyncpa [#allocation6], 0
    %26 = vsyncpa [#allocation9], 0
    %27 = vsyncpa [#allocation12], 0
    %28 = vsyncpa [#allocation15], 0
    %29 = vsyncpa [#allocation18], 0
    %30 = vsyncpa [#allocation4], 0
    // Predicated region
    $region2: #{tpu_custom_call.1} parent=1 // pred_check
      _
    $region3: #{tpu_custom_call.1} parent=1 // pred_check_branch
      %32 = sbr.rel (0) target = $region5
    $region4: #{tpu_custom_call.1} parent=1 // pred_region
      %s34 = ssub.s32 128, 128
      %35 = vsyncadd [#allocation3], %s34
      %s37 = sshll.u32 [#allocation2], 4
      %s38 = int_to_ptr.vmem [resolvable:$true] %s37
      %40 = dma.hbm_to_vmem [thread:$0]  %s0, 128, %s38, [#allocation3]
    $region5: #{tpu_custom_call.1} parent=1 // pred_fallthru
      _
    // Predicated region
    $region6: #{tpu_custom_call.1} parent=1 // pred_check
      _
    $region7: #{tpu_custom_call.1} parent=1 // pred_check_branch
      %42 = sbr.rel (0) target = $region9
    $region8: #{tpu_custom_call.1} parent=1 // pred_region
      %s44 = ssub.s32 2048, 2048
      %45 = vsyncadd [#allocation6], %s44
      %s46 = sshll.u32 [#allocation5], 4
      %s47 = int_to_ptr.vmem [resolvable:$true] %s46
      %52 = dma.hbm_to_vmem [thread:$0]  %s1, 2048, %s47, [#allocation6], 128, 128, 8
    $region9: #{tpu_custom_call.1} parent=1 // pred_fallthru
      _
    // Predicated region
    $region10: #{tpu_custom_call.1} parent=1 // pred_check
      _
    $region11: #{tpu_custom_call.1} parent=1 // pred_check_branch
      %54 = sbr.rel (0) target = $region13
    $region12: #{tpu_custom_call.1} parent=1 // pred_region
      %s56 = ssub.s32 2048, 2048
      %57 = vsyncadd [#allocation6], %s56
      %s58 = sshll.u32 [#allocation7], 4
      %s59 = int_to_ptr.vmem [resolvable:$true] %s58
      %64 = dma.hbm_to_vmem [thread:$0]  %s2, 2048, %s59, [#allocation6], 128, 128, 8
    $region13: #{tpu_custom_call.1} parent=1 // pred_fallthru
      _
    // Predicated region
    $region14: #{tpu_custom_call.1} parent=1 // pred_check
      _
    $region15: #{tpu_custom_call.1} parent=1 // pred_check_branch
      %66 = sbr.rel (0) target = $region17
    $region16: #{tpu_custom_call.1} parent=1 // pred_region
      %s68 = ssub.s32 2048, 2048
      %69 = vsyncadd [#allocation9], %s68
      %s70 = sshll.u32 [#allocation8], 4
      %s71 = int_to_ptr.vmem [resolvable:$true] %s70
      %76 = dma.hbm_to_vmem [thread:$0]  %s3, 2048, %s71, [#allocation9], 128, 128, 8
    $region17: #{tpu_custom_call.1} parent=1 // pred_fallthru
      _
    // Predicated region
    $region18: #{tpu_custom_call.1} parent=1 // pred_check
      _
    $region19: #{tpu_custom_call.1} parent=1 // pred_check_branch
      %78 = sbr.rel (0) target = $region21
    $region20: #{tpu_custom_call.1} parent=1 // pred_region
      _
    $region21: #{tpu_custom_call.1} parent=1 // pred_fallthru
      _
    // Predicated region
    $region22: #{tpu_custom_call.1} parent=1 // pred_check
      _
    $region23: #{tpu_custom_call.1} parent=1 // pred_check_branch
      %80 = sbr.rel (0) target = $region25
    $region24: #{tpu_custom_call.1} parent=1 // pred_region
      _
    $region25: #{tpu_custom_call.1} parent=1 // pred_fallthru
      _
    // Predicated region
    $region26: #{tpu_custom_call.1} parent=1 // pred_check
      _
    $region27: #{tpu_custom_call.1} parent=1 // pred_check_branch
      %82 = sbr.rel (0) target = $region29
    $region28: #{tpu_custom_call.1} parent=1 // pred_region
      _
    $region29: #{tpu_custom_call.1} parent=1 // pred_fallthru
      _
    // Predicated region
    $region30: #{tpu_custom_call.1} parent=1 // pred_check
      _
    $region31: #{tpu_custom_call.1} parent=1 // pred_check_branch
      %84 = sbr.rel (0) target = $region33
    $region32: #{tpu_custom_call.1} parent=1 // pred_region
      %s86 = ssub.s32 2048, 2048
      %87 = vsyncadd [#allocation9], %s86
      %s88 = sshll.u32 [#allocation10], 4
      %s89 = int_to_ptr.vmem [resolvable:$true] %s88
      %94 = dma.hbm_to_vmem [thread:$0]  %s7, 2048, %s89, [#allocation9], 128, 128, 8
    $region33: #{tpu_custom_call.1} parent=1 // pred_fallthru
      _
    // Predicated region
    $region34: #{tpu_custom_call.1} parent=1 // pred_check
      _
    $region35: #{tpu_custom_call.1} parent=1 // pred_check_branch
      %96 = sbr.rel (0) target = $region37
    $region36: #{tpu_custom_call.1} parent=1 // pred_region
      %s98 = ssub.s32 2048, 2048
      %99 = vsyncadd [#allocation12], %s98
      %s100 = sshll.u32 [#allocation11], 4
      %s101 = int_to_ptr.vmem [resolvable:$true] %s100
      %106 = dma.hbm_to_vmem [thread:$0]  %s8, 2048, %s101, [#allocation12], 128, 128, 8
    $region37: #{tpu_custom_call.1} parent=1 // pred_fallthru
      _
    // Predicated region
    $region38: #{tpu_custom_call.1} parent=1 // pred_check
      _
    $region39: #{tpu_custom_call.1} parent=1 // pred_check_branch
      %108 = sbr.rel (0) target = $region41
    $region40: #{tpu_custom_call.1} parent=1 // pred_region
      %s110 = ssub.s32 2048, 2048
      %111 = vsyncadd [#allocation12], %s110
      %s112 = sshll.u32 [#allocation13], 4
      %s113 = int_to_ptr.vmem [resolvable:$true] %s112
      %118 = dma.hbm_to_vmem [thread:$0]  %s9, 2048, %s113, [#allocation12], 128, 128, 8
    $region41: #{tpu_custom_call.1} parent=1 // pred_fallthru
      _
    // Predicated region
    $region42: #{tpu_custom_call.1} parent=1 // pred_check
      _
    $region43: #{tpu_custom_call.1} parent=1 // pred_check_branch
      %120 = sbr.rel (0) target = $region45
    $region44: #{tpu_custom_call.1} parent=1 // pred_region
      _
    $region45: #{tpu_custom_call.1} parent=1 // pred_fallthru
      _
    // Predicated region
    $region46: #{tpu_custom_call.1} parent=1 // pred_check
      _
    $region47: #{tpu_custom_call.1} parent=1 // pred_check_branch
      %122 = sbr.rel (0) target = $region49
    $region48: #{tpu_custom_call.1} parent=1 // pred_region
      _
    $region49: #{tpu_custom_call.1} parent=1 // pred_fallthru
      _
    // Predicated region
    $region50: #{tpu_custom_call.1} parent=1 // pred_check
      _
    $region51: #{tpu_custom_call.1} parent=1 // pred_check_branch
      %124 = sbr.rel (0) target = $region53
    $region52: #{tpu_custom_call.1} parent=1 // pred_region
      _
    $region53: #{tpu_custom_call.1} parent=1 // pred_fallthru
      _
    // Predicated region
    $region54: #{tpu_custom_call.1} parent=1 // pred_check
      _
    $region55: #{tpu_custom_call.1} parent=1 // pred_check_branch
      %126 = sbr.rel (0) target = $region57
    $region56: #{tpu_custom_call.1} parent=1 // pred_region
      %s128 = ssub.s32 2048, 2048
      %129 = vsyncadd [#allocation15], %s128
      %s130 = sshll.u32 [#allocation14], 4
      %s131 = int_to_ptr.vmem [resolvable:$true] %s130
      %136 = dma.hbm_to_vmem [thread:$0]  %s13, 2048, %s131, [#allocation15], 128, 128, 8
    $region57: #{tpu_custom_call.1} parent=1 // pred_fallthru
      _
    // Predicated region
    $region58: #{tpu_custom_call.1} parent=1 // pred_check
      _
    $region59: #{tpu_custom_call.1} parent=1 // pred_check_branch
      %138 = sbr.rel (0) target = $region61
    $region60: #{tpu_custom_call.1} parent=1 // pred_region
      %s140 = ssub.s32 2048, 2048
      %141 = vsyncadd [#allocation15], %s140
      %s142 = sshll.u32 [#allocation16], 4
      %s143 = int_to_ptr.vmem [resolvable:$true] %s142
      %148 = dma.hbm_to_vmem [thread:$0]  %s14, 2048, %s143, [#allocation15], 128, 128, 8
    $region61: #{tpu_custom_call.1} parent=1 // pred_fallthru
      _
    // Predicated region
    $region62: #{tpu_custom_call.1} parent=1 // pred_check
      _
    $region63: #{tpu_custom_call.1} parent=1 // pred_check_branch
      %150 = sbr.rel (0) target = $region65
    $region64: #{tpu_custom_call.1} parent=1 // pred_region
      %s152 = ssub.s32 2048, 2048
      %153 = vsyncadd [#allocation18], %s152
      %s154 = sshll.u32 [#allocation17], 4
      %s155 = int_to_ptr.vmem [resolvable:$true] %s154
      %160 = dma.hbm_to_vmem [thread:$0]  %s15, 2048, %s155, [#allocation18], 128, 128, 8
    $region65: #{tpu_custom_call.1} parent=1 // pred_fallthru
      _
    // Predicated region
    $region66: #{tpu_custom_call.1} parent=1 // pred_check
      _
    $region67: #{tpu_custom_call.1} parent=1 // pred_check_branch
      %162 = sbr.rel (0) target = $region69
    $region68: #{tpu_custom_call.1} parent=1 // pred_region
      _
    $region69: #{tpu_custom_call.1} parent=1 // pred_fallthru
      _
    // Predicated region
    $region70: #{tpu_custom_call.1} parent=1 // pred_check
      _
    $region71: #{tpu_custom_call.1} parent=1 // pred_check_branch
      %164 = sbr.rel (0) target = $region73
    $region72: #{tpu_custom_call.1} parent=1 // pred_region
      _
    $region73: #{tpu_custom_call.1} parent=1 // pred_fallthru
      _
    // Predicated region
    $region74: #{tpu_custom_call.1} parent=1 // pred_check
      _
    $region75: #{tpu_custom_call.1} parent=1 // pred_check_branch
      %166 = sbr.rel (0) target = $region77
    $region76: #{tpu_custom_call.1} parent=1 // pred_region
      _
    $region77: #{tpu_custom_call.1} parent=1 // pred_fallthru
      _
    // Predicated region
    $region78: #{tpu_custom_call.1} parent=1 // pred_check
      _
    $region79: #{tpu_custom_call.1} parent=1 // pred_check_branch
      %168 = sbr.rel (0) target = $region81
    $region80: #{tpu_custom_call.1} parent=1 // pred_region
      %169 = dma.done [#allocation3], 128
    $region81: #{tpu_custom_call.1} parent=1 // pred_fallthru
      _
    // Predicated region
    $region82: #{tpu_custom_call.1} parent=1 // pred_check
      _
    $region83: #{tpu_custom_call.1} parent=1 // pred_check_branch
      %171 = sbr.rel (0) target = $region85
    $region84: #{tpu_custom_call.1} parent=1 // pred_region
      %172 = dma.done [#allocation6], 2048
    $region85: #{tpu_custom_call.1} parent=1 // pred_fallthru
      _
    // Predicated region
    $region86: #{tpu_custom_call.1} parent=1 // pred_check
      _
    $region87: #{tpu_custom_call.1} parent=1 // pred_check_branch
      %174 = sbr.rel (0) target = $region89
    $region88: #{tpu_custom_call.1} parent=1 // pred_region
      %175 = dma.done [#allocation6], 2048
    $region89: #{tpu_custom_call.1} parent=1 // pred_fallthru
      _
    // Predicated region
    $region90: #{tpu_custom_call.1} parent=1 // pred_check
      _
    $region91: #{tpu_custom_call.1} parent=1 // pred_check_branch
      %177 = sbr.rel (0) target = $region93
    $region92: #{tpu_custom_call.1} parent=1 // pred_region
      %178 = dma.done [#allocation9], 2048
    $region93: #{tpu_custom_call.1} parent=1 // pred_fallthru
      _
    // Predicated region
    $region94: #{tpu_custom_call.1} parent=1 // pred_check
      _
    $region95: #{tpu_custom_call.1} parent=1 // pred_check_branch
      %180 = sbr.rel (0) target = $region97
    $region96: #{tpu_custom_call.1} parent=1 // pred_region
      %181 = dma.done [#allocation9], 2048
    $region97: #{tpu_custom_call.1} parent=1 // pred_fallthru
      _
    // Predicated region
    $region98: #{tpu_custom_call.1} parent=1 // pred_check
      _
    $region99: #{tpu_custom_call.1} parent=1 // pred_check_branch
      %183 = sbr.rel (0) target = $region101
    $region100: #{tpu_custom_call.1} parent=1 // pred_region
      %184 = dma.done [#allocation12], 2048
    $region101: #{tpu_custom_call.1} parent=1 // pred_fallthru
      _
    // Predicated region
    $region102: #{tpu_custom_call.1} parent=1 // pred_check
      _
    $region103: #{tpu_custom_call.1} parent=1 // pred_check_branch
      %186 = sbr.rel (0) target = $region105
    $region104: #{tpu_custom_call.1} parent=1 // pred_region
      %187 = dma.done [#allocation12], 2048
    $region105: #{tpu_custom_call.1} parent=1 // pred_fallthru
      _
    // Predicated region
    $region106: #{tpu_custom_call.1} parent=1 // pred_check
      _
    $region107: #{tpu_custom_call.1} parent=1 // pred_check_branch
      %189 = sbr.rel (0) target = $region109
    $region108: #{tpu_custom_call.1} parent=1 // pred_region
      %190 = dma.done [#allocation15], 2048
    $region109: #{tpu_custom_call.1} parent=1 // pred_fallthru
      _
    // Predicated region
    $region110: #{tpu_custom_call.1} parent=1 // pred_check
      _
    $region111: #{tpu_custom_call.1} parent=1 // pred_check_branch
      %192 = sbr.rel (0) target = $region113
    $region112: #{tpu_custom_call.1} parent=1 // pred_region
      %193 = dma.done [#allocation15], 2048
    $region113: #{tpu_custom_call.1} parent=1 // pred_fallthru
      _
    // Predicated region
    $region114: #{tpu_custom_call.1} parent=1 // pred_check
      _
    $region115: #{tpu_custom_call.1} parent=1 // pred_check_branch
      %195 = sbr.rel (0) target = $region117
    $region116: #{tpu_custom_call.1} parent=1 // pred_region
      %196 = dma.done [#allocation18], 2048
    $region117: #{tpu_custom_call.1} parent=1 // pred_fallthru
      _
    %v197 = vld [vmem:[#allocation2] sm:$0xff]
    %v198 = vld [vmem:[#allocation5] sm:$0xff]
    %v199 = vld [vmem:[#allocation5 + $0x8] sm:$0xff]
    %v200 = vld [vmem:[#allocation5 + $0x10] sm:$0xff]
    %v201 = vld [vmem:[#allocation5 + $0x18] sm:$0xff]
    %v202 = vld [vmem:[#allocation5 + $0x20] sm:$0xff]
    %v203 = vld [vmem:[#allocation5 + $0x28] sm:$0xff]
    %v204 = vld [vmem:[#allocation5 + $0x30] sm:$0xff]
    %v205 = vld [vmem:[#allocation5 + $0x38] sm:$0xff]
    %v206 = vld [vmem:[#allocation5 + $0x40] sm:$0xff]
    %v207 = vld [vmem:[#allocation5 + $0x48] sm:$0xff]
    %v208 = vld [vmem:[#allocation5 + $0x50] sm:$0xff]
    %v209 = vld [vmem:[#allocation5 + $0x58] sm:$0xff]
    %v210 = vld [vmem:[#allocation5 + $0x60] sm:$0xff]
    %v211 = vld [vmem:[#allocation5 + $0x68] sm:$0xff]
    %v212 = vld [vmem:[#allocation5 + $0x70] sm:$0xff]
    %v213 = vld [vmem:[#allocation5 + $0x78] sm:$0xff]
    %v214 = vld [vmem:[#allocation8] sm:$0xff]
    %v215 = vld [vmem:[#allocation8 + $0x8] sm:$0xff]
    %v216 = vld [vmem:[#allocation8 + $0x10] sm:$0xff]
    %v217 = vld [vmem:[#allocation8 + $0x18] sm:$0xff]
    %v218 = vld [vmem:[#allocation8 + $0x20] sm:$0xff]
    %v219 = vld [vmem:[#allocation8 + $0x28] sm:$0xff]
    %v220 = vld [vmem:[#allocation8 + $0x30] sm:$0xff]
    %v221 = vld [vmem:[#allocation8 + $0x38] sm:$0xff]
    %v222 = vld [vmem:[#allocation8 + $0x40] sm:$0xff]
    %v223 = vld [vmem:[#allocation8 + $0x48] sm:$0xff]
    %v224 = vld [vmem:[#allocation8 + $0x50] sm:$0xff]
    %v225 = vld [vmem:[#allocation8 + $0x58] sm:$0xff]
    %v226 = vld [vmem:[#allocation8 + $0x60] sm:$0xff]
    %v227 = vld [vmem:[#allocation8 + $0x68] sm:$0xff]
    %v228 = vld [vmem:[#allocation8 + $0x70] sm:$0xff]
    %v229 = vld [vmem:[#allocation8 + $0x78] sm:$0xff]
    %v230 = vld [vmem:[#allocation7] sm:$0xff]
    %v231 = vld [vmem:[#allocation7 + $0x8] sm:$0xff]
    %v232 = vld [vmem:[#allocation7 + $0x10] sm:$0xff]
    %v233 = vld [vmem:[#allocation7 + $0x18] sm:$0xff]
    %v234 = vld [vmem:[#allocation7 + $0x20] sm:$0xff]
    %v235 = vld [vmem:[#allocation7 + $0x28] sm:$0xff]
    %v236 = vld [vmem:[#allocation7 + $0x30] sm:$0xff]
    %v237 = vld [vmem:[#allocation7 + $0x38] sm:$0xff]
    %v238 = vld [vmem:[#allocation7 + $0x40] sm:$0xff]
    %v239 = vld [vmem:[#allocation7 + $0x48] sm:$0xff]
    %v240 = vld [vmem:[#allocation7 + $0x50] sm:$0xff]
    %v241 = vld [vmem:[#allocation7 + $0x58] sm:$0xff]
    %v242 = vld [vmem:[#allocation7 + $0x60] sm:$0xff]
    %v243 = vld [vmem:[#allocation7 + $0x68] sm:$0xff]
    %v244 = vld [vmem:[#allocation7 + $0x70] sm:$0xff]
    %v245 = vld [vmem:[#allocation7 + $0x78] sm:$0xff]
    %v246 = vmul.f32 %v214, %v230
    %v247 = vmul.f32 %v215, %v231
    %v248 = vmul.f32 %v216, %v232
    %v249 = vmul.f32 %v217, %v233
    %v250 = vmul.f32 %v218, %v234
    %v251 = vmul.f32 %v219, %v235
    %v252 = vmul.f32 %v220, %v236
    %v253 = vmul.f32 %v221, %v237
    %v254 = vmul.f32 %v222, %v238
    %v255 = vmul.f32 %v223, %v239
    %v256 = vmul.f32 %v224, %v240
    %v257 = vmul.f32 %v225, %v241
    %v258 = vmul.f32 %v226, %v242
    %v259 = vmul.f32 %v227, %v243
    %v260 = vmul.f32 %v228, %v244
    %v261 = vmul.f32 %v229, %v245
    %v262 = vadd.f32 %v198, %v246
    %v263 = vadd.f32 %v199, %v247
    %v264 = vadd.f32 %v200, %v248
    %v265 = vadd.f32 %v201, %v249
    %v266 = vadd.f32 %v202, %v250
    %v267 = vadd.f32 %v203, %v251
    %v268 = vadd.f32 %v204, %v252
    %v269 = vadd.f32 %v205, %v253
    %v270 = vadd.f32 %v206, %v254
    %v271 = vadd.f32 %v207, %v255
    %v272 = vadd.f32 %v208, %v256
    %v273 = vadd.f32 %v209, %v257
    %v274 = vadd.f32 %v210, %v258
    %v275 = vadd.f32 %v211, %v259
    %v276 = vadd.f32 %v212, %v260
    %v277 = vadd.f32 %v213, %v261
    %v278 = vld [vmem:[%s4] sm:$0x1]
    %v279 = vld [vmem:[%s6] sm:$0x1]
    %v280 = vld [vmem:[%s5] sm:$0x1]
    %v281 = vmul.f32 %v279, %v280
    %v282 = vadd.f32 %v278, %v281
    %v284 = vlaneseq
    %v285 = vshrl.u32 %v284, 7
    %v286 = vsub.s32 0, %v285
    %v287 = vrot.slane %v282, %v286
    %289 = vmatprep.subr.mxu0 0.0
    %290 = vmatpush1.xpose.msra.mxu0 %v262
    %291 = vmatprep.subr.mxu0 0.0
    %292 = vmatpush1.xpose.msra.mxu0 %v263
    %293 = vmatprep.subr.mxu0 0.0
    %294 = vmatpush1.xpose.msra.mxu0 %v264
    %295 = vmatprep.subr.mxu0 0.0
    %296 = vmatpush1.xpose.msra.mxu0 %v265
    %297 = vmatprep.subr.mxu0 0.0
    %298 = vmatpush1.xpose.msra.mxu0 %v266
    %299 = vmatprep.subr.mxu0 0.0
    %300 = vmatpush1.xpose.msra.mxu0 %v267
    %301 = vmatprep.subr.mxu0 0.0
    %302 = vmatpush1.xpose.msra.mxu0 %v268
    %303 = vmatprep.subr.mxu0 0.0
    %304 = vmatpush1.xpose.msra.mxu0 %v269
    %305 = vmatprep.subr.mxu0 0.0
    %306 = vmatpush1.xpose.msra.mxu0 %v270
    %307 = vmatprep.subr.mxu0 0.0
    %308 = vmatpush1.xpose.msra.mxu0 %v271
    %309 = vmatprep.subr.mxu0 0.0
    %310 = vmatpush1.xpose.msra.mxu0 %v272
    %311 = vmatprep.subr.mxu0 0.0
    %312 = vmatpush1.xpose.msra.mxu0 %v273
    %313 = vmatprep.subr.mxu0 0.0
    %314 = vmatpush1.xpose.msra.mxu0 %v274
    %315 = vmatprep.subr.mxu0 0.0
    %316 = vmatpush1.xpose.msra.mxu0 %v275
    %317 = vmatprep.subr.mxu0 0.0
    %318 = vmatpush1.xpose.msra.mxu0 %v276
    %319 = vmatprep.subr.mxu0 0.0
    %320 = vmatpush1.xpose.msra.mxu0 %v277
    %321 = vmatprep.subr.mxu0 0.0
    %322 = vmatpush1.xpose.msra.mxu0 0.0
    %323 = vmatprep.subr.mxu0 0.0
    %324 = vmatpush1.xpose.msra.mxu0 0.0
    %325 = vmatprep.subr.mxu0 0.0
    %326 = vmatpush1.xpose.msra.mxu0 0.0
    %327 = vmatprep.subr.mxu0 0.0
    %328 = vmatpush1.xpose.msra.mxu0 0.0
    %329 = vmatprep.subr.mxu0 0.0
    %330 = vmatpush1.xpose.msra.mxu0 0.0
    %331 = vmatprep.subr.mxu0 0.0
    %332 = vmatpush1.xpose.msra.mxu0 0.0
    %333 = vmatprep.subr.mxu0 0.0
    %334 = vmatpush1.xpose.msra.mxu0 0.0
    %335 = vmatprep.subr.mxu0 0.0
    %336 = vmatpush1.xpose.msra.mxu0 0.0
    %337 = vmatprep.subr.mxu0 0.0
    %338 = vmatpush1.xpose.msra.mxu0 0.0
    %339 = vmatprep.subr.mxu0 0.0
    %340 = vmatpush1.xpose.msra.mxu0 0.0
    %341 = vmatprep.subr.mxu0 0.0
    %342 = vmatpush1.xpose.msra.mxu0 0.0
    %343 = vmatprep.subr.mxu0 0.0
    %344 = vmatpush1.xpose.msra.mxu0 0.0
    %345 = vmatprep.subr.mxu0 0.0
    %346 = vmatpush1.xpose.msra.mxu0 0.0
    %347 = vmatprep.subr.mxu0 0.0
    %348 = vmatpush1.xpose.msra.mxu0 0.0
    %349 = vmatprep.subr.mxu0 0.0
    %350 = vmatpush1.xpose.msra.mxu0 0.0
    %351 = vmatprep.subr.mxu0 0.0
    %352 = vmatpush1.xpose.msra.mxu0 0.0
    %353 = vmatprep.mubr.f32.mxu0 0.0
    %354 = vmatmul.mubr.f32.gmra.mrb[0].mxu0 %v197
    %v355 = vpop.f32.mrb[0].mxu0
    %v356 = vadd.f32 %v287, %v355
    %v357 = vpop.f32.mrb[0].mxu0
    %358 = vdwg.mxu0
    %v359 = vmax.f32 %v356, 0.0
    %v360 = vld [vmem:[#allocation10] sm:$0xff]
    %v361 = vld [vmem:[#allocation10 + $0x8] sm:$0xff]
    %v362 = vld [vmem:[#allocation10 + $0x10] sm:$0xff]
    %v363 = vld [vmem:[#allocation10 + $0x18] sm:$0xff]
    %v364 = vld [vmem:[#allocation10 + $0x20] sm:$0xff]
    %v365 = vld [vmem:[#allocation10 + $0x28] sm:$0xff]
    %v366 = vld [vmem:[#allocation10 + $0x30] sm:$0xff]
    %v367 = vld [vmem:[#allocation10 + $0x38] sm:$0xff]
    %v368 = vld [vmem:[#allocation10 + $0x40] sm:$0xff]
    %v369 = vld [vmem:[#allocation10 + $0x48] sm:$0xff]
    %v370 = vld [vmem:[#allocation10 + $0x50] sm:$0xff]
    %v371 = vld [vmem:[#allocation10 + $0x58] sm:$0xff]
    %v372 = vld [vmem:[#allocation10 + $0x60] sm:$0xff]
    %v373 = vld [vmem:[#allocation10 + $0x68] sm:$0xff]
    %v374 = vld [vmem:[#allocation10 + $0x70] sm:$0xff]
    %v375 = vld [vmem:[#allocation10 + $0x78] sm:$0xff]
    %v376 = vld [vmem:[#allocation13] sm:$0xff]
    %v377 = vld [vmem:[#allocation13 + $0x8] sm:$0xff]
    %v378 = vld [vmem:[#allocation13 + $0x10] sm:$0xff]
    %v379 = vld [vmem:[#allocation13 + $0x18] sm:$0xff]
    %v380 = vld [vmem:[#allocation13 + $0x20] sm:$0xff]
    %v381 = vld [vmem:[#allocation13 + $0x28] sm:$0xff]
    %v382 = vld [vmem:[#allocation13 + $0x30] sm:$0xff]
    %v383 = vld [vmem:[#allocation13 + $0x38] sm:$0xff]
    %v384 = vld [vmem:[#allocation13 + $0x40] sm:$0xff]
    %v385 = vld [vmem:[#allocation13 + $0x48] sm:$0xff]
    %v386 = vld [vmem:[#allocation13 + $0x50] sm:$0xff]
    %v387 = vld [vmem:[#allocation13 + $0x58] sm:$0xff]
    %v388 = vld [vmem:[#allocation13 + $0x60] sm:$0xff]
    %v389 = vld [vmem:[#allocation13 + $0x68] sm:$0xff]
    %v390 = vld [vmem:[#allocation13 + $0x70] sm:$0xff]
    %v391 = vld [vmem:[#allocation13 + $0x78] sm:$0xff]
    %v392 = vld [vmem:[#allocation11] sm:$0xff]
    %v393 = vld [vmem:[#allocation11 + $0x8] sm:$0xff]
    %v394 = vld [vmem:[#allocation11 + $0x10] sm:$0xff]
    %v395 = vld [vmem:[#allocation11 + $0x18] sm:$0xff]
    %v396 = vld [vmem:[#allocation11 + $0x20] sm:$0xff]
    %v397 = vld [vmem:[#allocation11 + $0x28] sm:$0xff]
    %v398 = vld [vmem:[#allocation11 + $0x30] sm:$0xff]
    %v399 = vld [vmem:[#allocation11 + $0x38] sm:$0xff]
    %v400 = vld [vmem:[#allocation11 + $0x40] sm:$0xff]
    %v401 = vld [vmem:[#allocation11 + $0x48] sm:$0xff]
    %v402 = vld [vmem:[#allocation11 + $0x50] sm:$0xff]
    %v403 = vld [vmem:[#allocation11 + $0x58] sm:$0xff]
    %v404 = vld [vmem:[#allocation11 + $0x60] sm:$0xff]
    %v405 = vld [vmem:[#allocation11 + $0x68] sm:$0xff]
    %v406 = vld [vmem:[#allocation11 + $0x70] sm:$0xff]
    %v407 = vld [vmem:[#allocation11 + $0x78] sm:$0xff]
    %v408 = vmul.f32 %v376, %v392
    %v409 = vmul.f32 %v377, %v393
    %v410 = vmul.f32 %v378, %v394
    %v411 = vmul.f32 %v379, %v395
    %v412 = vmul.f32 %v380, %v396
    %v413 = vmul.f32 %v381, %v397
    %v414 = vmul.f32 %v382, %v398
    %v415 = vmul.f32 %v383, %v399
    %v416 = vmul.f32 %v384, %v400
    %v417 = vmul.f32 %v385, %v401
    %v418 = vmul.f32 %v386, %v402
    %v419 = vmul.f32 %v387, %v403
    %v420 = vmul.f32 %v388, %v404
    %v421 = vmul.f32 %v389, %v405
    %v422 = vmul.f32 %v390, %v406
    %v423 = vmul.f32 %v391, %v407
    %v424 = vadd.f32 %v360, %v408
    %v425 = vadd.f32 %v361, %v409
    %v426 = vadd.f32 %v362, %v410
    %v427 = vadd.f32 %v363, %v411
    %v428 = vadd.f32 %v364, %v412
    %v429 = vadd.f32 %v365, %v413
    %v430 = vadd.f32 %v366, %v414
    %v431 = vadd.f32 %v367, %v415
    %v432 = vadd.f32 %v368, %v416
    %v433 = vadd.f32 %v369, %v417
    %v434 = vadd.f32 %v370, %v418
    %v435 = vadd.f32 %v371, %v419
    %v436 = vadd.f32 %v372, %v420
    %v437 = vadd.f32 %v373, %v421
    %v438 = vadd.f32 %v374, %v422
    %v439 = vadd.f32 %v375, %v423
    %v440 = vld [vmem:[%s10] sm:$0x1]
    %v441 = vld [vmem:[%s12] sm:$0x1]
    %v442 = vld [vmem:[%s11] sm:$0x1]
    %v443 = vmul.f32 %v441, %v442
    %v444 = vadd.f32 %v440, %v443
    %v446 = vlaneseq
    %v447 = vshrl.u32 %v446, 7
    %v448 = vsub.s32 0, %v447
    %v449 = vrot.slane %v444, %v448
    %451 = vmatprep.subr.mxu0 0.0
    %452 = vmatpush1.xpose.msra.mxu0 %v424
    %453 = vmatprep.subr.mxu0 0.0
    %454 = vmatpush1.xpose.msra.mxu0 %v425
    %455 = vmatprep.subr.mxu0 0.0
    %456 = vmatpush1.xpose.msra.mxu0 %v426
    %457 = vmatprep.subr.mxu0 0.0
    %458 = vmatpush1.xpose.msra.mxu0 %v427
    %459 = vmatprep.subr.mxu0 0.0
    %460 = vmatpush1.xpose.msra.mxu0 %v428
    %461 = vmatprep.subr.mxu0 0.0
    %462 = vmatpush1.xpose.msra.mxu0 %v429
    %463 = vmatprep.subr.mxu0 0.0
    %464 = vmatpush1.xpose.msra.mxu0 %v430
    %465 = vmatprep.subr.mxu0 0.0
    %466 = vmatpush1.xpose.msra.mxu0 %v431
    %467 = vmatprep.subr.mxu0 0.0
    %468 = vmatpush1.xpose.msra.mxu0 %v432
    %469 = vmatprep.subr.mxu0 0.0
    %470 = vmatpush1.xpose.msra.mxu0 %v433
    %471 = vmatprep.subr.mxu0 0.0
    %472 = vmatpush1.xpose.msra.mxu0 %v434
    %473 = vmatprep.subr.mxu0 0.0
    %474 = vmatpush1.xpose.msra.mxu0 %v435
    %475 = vmatprep.subr.mxu0 0.0
    %476 = vmatpush1.xpose.msra.mxu0 %v436
    %477 = vmatprep.subr.mxu0 0.0
    %478 = vmatpush1.xpose.msra.mxu0 %v437
    %479 = vmatprep.subr.mxu0 0.0
    %480 = vmatpush1.xpose.msra.mxu0 %v438
    %481 = vmatprep.subr.mxu0 0.0
    %482 = vmatpush1.xpose.msra.mxu0 %v439
    %483 = vmatprep.subr.mxu0 0.0
    %484 = vmatpush1.xpose.msra.mxu0 0.0
    %485 = vmatprep.subr.mxu0 0.0
    %486 = vmatpush1.xpose.msra.mxu0 0.0
    %487 = vmatprep.subr.mxu0 0.0
    %488 = vmatpush1.xpose.msra.mxu0 0.0
    %489 = vmatprep.subr.mxu0 0.0
    %490 = vmatpush1.xpose.msra.mxu0 0.0
    %491 = vmatprep.subr.mxu0 0.0
    %492 = vmatpush1.xpose.msra.mxu0 0.0
    %493 = vmatprep.subr.mxu0 0.0
    %494 = vmatpush1.xpose.msra.mxu0 0.0
    %495 = vmatprep.subr.mxu0 0.0
    %496 = vmatpush1.xpose.msra.mxu0 0.0
    %497 = vmatprep.subr.mxu0 0.0
    %498 = vmatpush1.xpose.msra.mxu0 0.0
    %499 = vmatprep.subr.mxu0 0.0
    %500 = vmatpush1.xpose.msra.mxu0 0.0
    %501 = vmatprep.subr.mxu0 0.0
    %502 = vmatpush1.xpose.msra.mxu0 0.0
    %503 = vmatprep.subr.mxu0 0.0
    %504 = vmatpush1.xpose.msra.mxu0 0.0
    %505 = vmatprep.subr.mxu0 0.0
    %506 = vmatpush1.xpose.msra.mxu0 0.0
    %507 = vmatprep.subr.mxu0 0.0
    %508 = vmatpush1.xpose.msra.mxu0 0.0
    %509 = vmatprep.subr.mxu0 0.0
    %510 = vmatpush1.xpose.msra.mxu0 0.0
    %511 = vmatprep.subr.mxu0 0.0
    %512 = vmatpush1.xpose.msra.mxu0 0.0
    %513 = vmatprep.subr.mxu0 0.0
    %514 = vmatpush1.xpose.msra.mxu0 0.0
    %515 = vmatprep.mubr.f32.mxu0 0.0
    %516 = vmatmul.mubr.f32.gmra.mrb[0].mxu0 %v359
    %v517 = vpop.f32.mrb[0].mxu0
    %v518 = vadd.f32 %v449, %v517
    %v519 = vpop.f32.mrb[0].mxu0
    %520 = vdwg.mxu0
    %v521 = vmax.f32 %v518, 0.0
    %v522 = vld [vmem:[#allocation14] sm:$0xff]
    %v523 = vld [vmem:[#allocation14 + $0x8] sm:$0xff]
    %v524 = vld [vmem:[#allocation14 + $0x10] sm:$0xff]
    %v525 = vld [vmem:[#allocation14 + $0x18] sm:$0xff]
    %v526 = vld [vmem:[#allocation14 + $0x20] sm:$0xff]
    %v527 = vld [vmem:[#allocation14 + $0x28] sm:$0xff]
    %v528 = vld [vmem:[#allocation14 + $0x30] sm:$0xff]
    %v529 = vld [vmem:[#allocation14 + $0x38] sm:$0xff]
    %v530 = vld [vmem:[#allocation14 + $0x40] sm:$0xff]
    %v531 = vld [vmem:[#allocation14 + $0x48] sm:$0xff]
    %v532 = vld [vmem:[#allocation14 + $0x50] sm:$0xff]
    %v533 = vld [vmem:[#allocation14 + $0x58] sm:$0xff]
    %v534 = vld [vmem:[#allocation14 + $0x60] sm:$0xff]
    %v535 = vld [vmem:[#allocation14 + $0x68] sm:$0xff]
    %v536 = vld [vmem:[#allocation14 + $0x70] sm:$0xff]
    %v537 = vld [vmem:[#allocation14 + $0x78] sm:$0xff]
    %v538 = vld [vmem:[#allocation17] sm:$0xff]
    %v539 = vld [vmem:[#allocation17 + $0x8] sm:$0xff]
    %v540 = vld [vmem:[#allocation17 + $0x10] sm:$0xff]
    %v541 = vld [vmem:[#allocation17 + $0x18] sm:$0xff]
    %v542 = vld [vmem:[#allocation17 + $0x20] sm:$0xff]
    %v543 = vld [vmem:[#allocation17 + $0x28] sm:$0xff]
    %v544 = vld [vmem:[#allocation17 + $0x30] sm:$0xff]
    %v545 = vld [vmem:[#allocation17 + $0x38] sm:$0xff]
    %v546 = vld [vmem:[#allocation17 + $0x40] sm:$0xff]
    %v547 = vld [vmem:[#allocation17 + $0x48] sm:$0xff]
    %v548 = vld [vmem:[#allocation17 + $0x50] sm:$0xff]
    %v549 = vld [vmem:[#allocation17 + $0x58] sm:$0xff]
    %v550 = vld [vmem:[#allocation17 + $0x60] sm:$0xff]
    %v551 = vld [vmem:[#allocation17 + $0x68] sm:$0xff]
    %v552 = vld [vmem:[#allocation17 + $0x70] sm:$0xff]
    %v553 = vld [vmem:[#allocation17 + $0x78] sm:$0xff]
    %v554 = vld [vmem:[#allocation16] sm:$0xff]
    %v555 = vld [vmem:[#allocation16 + $0x8] sm:$0xff]
    %v556 = vld [vmem:[#allocation16 + $0x10] sm:$0xff]
    %v557 = vld [vmem:[#allocation16 + $0x18] sm:$0xff]
    %v558 = vld [vmem:[#allocation16 + $0x20] sm:$0xff]
    %v559 = vld [vmem:[#allocation16 + $0x28] sm:$0xff]
    %v560 = vld [vmem:[#allocation16 + $0x30] sm:$0xff]
    %v561 = vld [vmem:[#allocation16 + $0x38] sm:$0xff]
    %v562 = vld [vmem:[#allocation16 + $0x40] sm:$0xff]
    %v563 = vld [vmem:[#allocation16 + $0x48] sm:$0xff]
    %v564 = vld [vmem:[#allocation16 + $0x50] sm:$0xff]
    %v565 = vld [vmem:[#allocation16 + $0x58] sm:$0xff]
    %v566 = vld [vmem:[#allocation16 + $0x60] sm:$0xff]
    %v567 = vld [vmem:[#allocation16 + $0x68] sm:$0xff]
    %v568 = vld [vmem:[#allocation16 + $0x70] sm:$0xff]
    %v569 = vld [vmem:[#allocation16 + $0x78] sm:$0xff]
    %v570 = vmul.f32 %v538, %v554
    %v571 = vmul.f32 %v539, %v555
    %v572 = vmul.f32 %v540, %v556
    %v573 = vmul.f32 %v541, %v557
    %v574 = vmul.f32 %v542, %v558
    %v575 = vmul.f32 %v543, %v559
    %v576 = vmul.f32 %v544, %v560
    %v577 = vmul.f32 %v545, %v561
    %v578 = vmul.f32 %v546, %v562
    %v579 = vmul.f32 %v547, %v563
    %v580 = vmul.f32 %v548, %v564
    %v581 = vmul.f32 %v549, %v565
    %v582 = vmul.f32 %v550, %v566
    %v583 = vmul.f32 %v551, %v567
    %v584 = vmul.f32 %v552, %v568
    %v585 = vmul.f32 %v553, %v569
    %v586 = vadd.f32 %v522, %v570
    %v587 = vadd.f32 %v523, %v571
    %v588 = vadd.f32 %v524, %v572
    %v589 = vadd.f32 %v525, %v573
    %v590 = vadd.f32 %v526, %v574
    %v591 = vadd.f32 %v527, %v575
    %v592 = vadd.f32 %v528, %v576
    %v593 = vadd.f32 %v529, %v577
    %v594 = vadd.f32 %v530, %v578
    %v595 = vadd.f32 %v531, %v579
    %v596 = vadd.f32 %v532, %v580
    %v597 = vadd.f32 %v533, %v581
    %v598 = vadd.f32 %v534, %v582
    %v599 = vadd.f32 %v535, %v583
    %v600 = vadd.f32 %v536, %v584
    %v601 = vadd.f32 %v537, %v585
    %v602 = vld [vmem:[%s16] sm:$0x1]
    %v603 = vld [vmem:[%s18] sm:$0x1]
    %v604 = vld [vmem:[%s17] sm:$0x1]
    %v605 = vmul.f32 %v603, %v604
    %v606 = vadd.f32 %v602, %v605
    %v608 = vlaneseq
    %v609 = vshrl.u32 %v608, 7
    %v610 = vsub.s32 0, %v609
    %v611 = vrot.slane %v606, %v610
    %613 = vmatprep.subr.mxu0 0.0
    %614 = vmatpush1.xpose.msra.mxu0 %v586
    %615 = vmatprep.subr.mxu0 0.0
    %616 = vmatpush1.xpose.msra.mxu0 %v587
    %617 = vmatprep.subr.mxu0 0.0
    %618 = vmatpush1.xpose.msra.mxu0 %v588
    %619 = vmatprep.subr.mxu0 0.0
    %620 = vmatpush1.xpose.msra.mxu0 %v589
    %621 = vmatprep.subr.mxu0 0.0
    %622 = vmatpush1.xpose.msra.mxu0 %v590
    %623 = vmatprep.subr.mxu0 0.0
    %624 = vmatpush1.xpose.msra.mxu0 %v591
    %625 = vmatprep.subr.mxu0 0.0
    %626 = vmatpush1.xpose.msra.mxu0 %v592
    %627 = vmatprep.subr.mxu0 0.0
    %628 = vmatpush1.xpose.msra.mxu0 %v593
    %629 = vmatprep.subr.mxu0 0.0
    %630 = vmatpush1.xpose.msra.mxu0 %v594
    %631 = vmatprep.subr.mxu0 0.0
    %632 = vmatpush1.xpose.msra.mxu0 %v595
    %633 = vmatprep.subr.mxu0 0.0
    %634 = vmatpush1.xpose.msra.mxu0 %v596
    %635 = vmatprep.subr.mxu0 0.0
    %636 = vmatpush1.xpose.msra.mxu0 %v597
    %637 = vmatprep.subr.mxu0 0.0
    %638 = vmatpush1.xpose.msra.mxu0 %v598
    %639 = vmatprep.subr.mxu0 0.0
    %640 = vmatpush1.xpose.msra.mxu0 %v599
    %641 = vmatprep.subr.mxu0 0.0
    %642 = vmatpush1.xpose.msra.mxu0 %v600
    %643 = vmatprep.subr.mxu0 0.0
    %644 = vmatpush1.xpose.msra.mxu0 %v601
    %645 = vmatprep.subr.mxu0 0.0
    %646 = vmatpush1.xpose.msra.mxu0 0.0
    %647 = vmatprep.subr.mxu0 0.0
    %648 = vmatpush1.xpose.msra.mxu0 0.0
    %649 = vmatprep.subr.mxu0 0.0
    %650 = vmatpush1.xpose.msra.mxu0 0.0
    %651 = vmatprep.subr.mxu0 0.0
    %652 = vmatpush1.xpose.msra.mxu0 0.0
    %653 = vmatprep.subr.mxu0 0.0
    %654 = vmatpush1.xpose.msra.mxu0 0.0
    %655 = vmatprep.subr.mxu0 0.0
    %656 = vmatpush1.xpose.msra.mxu0 0.0
    %657 = vmatprep.subr.mxu0 0.0
    %658 = vmatpush1.xpose.msra.mxu0 0.0
    %659 = vmatprep.subr.mxu0 0.0
    %660 = vmatpush1.xpose.msra.mxu0 0.0
    %661 = vmatprep.subr.mxu0 0.0
    %662 = vmatpush1.xpose.msra.mxu0 0.0
    %663 = vmatprep.subr.mxu0 0.0
    %664 = vmatpush1.xpose.msra.mxu0 0.0
    %665 = vmatprep.subr.mxu0 0.0
    %666 = vmatpush1.xpose.msra.mxu0 0.0
    %667 = vmatprep.subr.mxu0 0.0
    %668 = vmatpush1.xpose.msra.mxu0 0.0
    %669 = vmatprep.subr.mxu0 0.0
    %670 = vmatpush1.xpose.msra.mxu0 0.0
    %671 = vmatprep.subr.mxu0 0.0
    %672 = vmatpush1.xpose.msra.mxu0 0.0
    %673 = vmatprep.subr.mxu0 0.0
    %674 = vmatpush1.xpose.msra.mxu0 0.0
    %675 = vmatprep.subr.mxu0 0.0
    %676 = vmatpush1.xpose.msra.mxu0 0.0
    %677 = vmatprep.mubr.f32.mxu0 0.0
    %678 = vmatmul.mubr.f32.gmra.mrb[0].mxu0 %v521
    %v679 = vpop.f32.mrb[0].mxu0
    %v680 = vadd.f32 %v611, %v679
    %v681 = vpop.f32.mrb[0].mxu0
    %682 = vdwg.mxu0
    %683 = vst [vmem:[#allocation19] sm:$0xff] %v680
    // Predicated region
    $region118: #{tpu_custom_call.1} parent=1 // pred_check
      _
    $region119: #{tpu_custom_call.1} parent=1 // pred_check_branch
      %685 = sbr.rel (0) target = $region121
    $region120: #{tpu_custom_call.1} parent=1 // pred_region
      %s687 = ssub.s32 128, 128
      %688 = vsyncadd [#allocation4], %s687
      %s690 = sshll.u32 [#allocation19], 4
      %s691 = int_to_ptr.vmem [resolvable:$true] %s690
      %693 = dma.vmem_to_hbm [thread:$0]  %s691, 128, %s19, [#allocation4]
    $region121: #{tpu_custom_call.1} parent=1 // pred_fallthru
      _
    // Predicated region
    $region122: #{tpu_custom_call.1} parent=1 // pred_check
      _
    $region123: #{tpu_custom_call.1} parent=1 // pred_check_branch
      %695 = sbr.rel (0) target = $region125
    $region124: #{tpu_custom_call.1} parent=1 // pred_region
      %696 = dma.done [#allocation4], 128
    $region125: #{tpu_custom_call.1} parent=1 // pred_fallthru
      _
    %697 = vsyncpa [#allocation3], 1
    %698 = vsyncpa [#allocation6], 1
    %699 = vsyncpa [#allocation9], 1
    %700 = vsyncpa [#allocation12], 1
    %701 = vsyncpa [#allocation15], 1
    %702 = vsyncpa [#allocation18], 1
    %703 = vsyncpa [#allocation4], 1

</llo_original>
